<compile_context>
chip_gen: v7x
topology: tpu7x:2x2x1
jax: 0.10.0
libtpu: 0.0.40
codegen_flags: <defaults>
</compile_context>

<pallas_src>
import math

import jax
import jax.numpy as jnp
from jax.experimental import pallas as pl
from jax.experimental.pallas import tpu as pltpu


def make_dct_matrix(n: int) -> jnp.ndarray:
    """Deterministic DCT-II style matrix, identical to DCTLayer.get_dct_matrix."""
    k = jnp.arange(n, dtype=jnp.float32)[:, None]          # (N, 1)
    i = jnp.arange(n, dtype=jnp.float32)[None, :]          # (1, N)
    w = jnp.where(k == 0,
                  jnp.sqrt(jnp.float32(1.0 / n)),
                  jnp.sqrt(jnp.float32(2.0 / n)))          # (N, 1)
    dct_m = w * jnp.cos(jnp.float32(math.pi) * (i + 0.5) * k / n)
    return dct_m.astype(jnp.float32)                       # (N, N)


def _dct_kernel(m_ref, x_ref, o_ref):
    # m_ref: (N, N) f32, resident across the whole grid.
    # x_ref / o_ref: (TB, N, TD) tile of x / y in the native (B, N, D) layout.
    tb = x_ref.shape[0]
    m = jnp.broadcast_to(m_ref[...], (tb,) + m_ref.shape)       # (TB, N, N) f32
    x = x_ref[...].astype(jnp.float32)                          # upcast is a VPU op in idle slots
    y = jnp.einsum("bkn,bnd->bkd", m, x,
                   preferred_element_type=jnp.float32)          # batched MXU matmul
    o_ref[...] = y.astype(o_ref.dtype)


def dct_forward(dct_m: jnp.ndarray,
                x: jnp.ndarray,
                *,
                compute_dtype=None,
                out_dtype=None,
                tile_bytes: int = 2 * 1024 * 1024) -> jnp.ndarray:
    """y[b] = dct_m @ x[b], computed directly in the native (B, N, D) layout."""
    B, N, D = x.shape
    assert dct_m.shape == (N, N)
    out_dtype = out_dtype if out_dtype is not None else x.dtype

    # Keep the transform matrix in f32: it is a resident 4 KiB constant, so
    # casting it saves no HBM bandwidth and only injects rounding error.
    dct_m = dct_m.astype(jnp.float32)
    # Optional bf16 path for x: halves the dominant HBM read stream.
    if compute_dtype is not None:
        x = x.astype(compute_dtype)
    itemsize = x.dtype.itemsize

    # ---- feature tile TD (lane axis) ----
    # Prefer a multiple of 128 that divides D (unmasked lane-dense stores);
    # otherwise use the full D (allowed: full array dim), accepting masked vst.
    if D % 128 == 0:
        max_lanes = max(128, (tile_bytes // (N * itemsize) // 128) * 128)
        TD = 128
        for cand in range(min(D, max_lanes), 127, -128):
            if D % cand == 0:
                TD = cand
                break
    else:
        TD = D
    n_d_tiles = D // TD

    # ---- batch tile TB ----
    # Grow toward ~tile_bytes per input tile, but keep >= 2 grid steps when
    # possible so the "parallel" axes can be sharded across v7x's 2 TCs.
    bytes_per_batch_row = N * TD * itemsize
    TB = max(1, min(B, tile_bytes // max(1, bytes_per_batch_row)))
    while B % TB != 0:
        TB -= 1
    if n_d_tiles * (B // TB) < 2 and B > 1:
        TB = max(1, B // 2)
        while B % TB != 0:
            TB -= 1

    grid = (B // TB, n_d_tiles)

    cost = pl.CostEstimate(
        flops=2 * B * N * N * D,
        transcendentals=0,
        bytes_accessed=B * N * D * (itemsize + jnp.dtype(out_dtype).itemsize)
        + N * N * 4,
    )

    y = pl.pallas_call(
        _dct_kernel,
        out_shape=jax.ShapeDtypeStruct((B, N, D), out_dtype),
        grid_spec=pl.GridSpec(
            grid=grid,
            in_specs=[
                pl.BlockSpec((N, N), lambda b, j: (0, 0)),            # resident DCT matrix
                pl.BlockSpec((TB, N, TD), lambda b, j: (b, 0, j)),    # native-layout x tile
            ],
            out_specs=pl.BlockSpec((TB, N, TD), lambda b, j: (b, 0, j)),
        ),
        compiler_params=pltpu.CompilerParams(
            dimension_semantics=("parallel", "parallel"),
            # Double-buffered ~2 MiB in/out tiles + resident dct_m << 32 MiB;
            # stays well under v7x's 64 MiB per-TC VMEM (review: keep <= ~48 MiB).
            vmem_limit_bytes=32 * 1024 * 1024,
        ),
        cost_estimate=cost,
    )(dct_m, x)
    return y


if __name__ == "__main__":
    frames = 32   # N (frame axis, contracted)
    batch = 2
    feat = 64     # trailing feature dim (not lane-aligned -> masked-store path)

    key = jax.random.PRNGKey(0)
    x = jax.random.normal(key, (batch, frames, feat), dtype=jnp.float32)

    dct_m = make_dct_matrix(frames)

    # Reference (same math as torch.matmul(dct_m, x)).
    y_ref = jnp.einsum("kn,bnd->bkd", dct_m, x)

    # Exact f32 path.
    y = jax.block_until_ready(dct_forward(dct_m, x))
    assert y.shape == (batch, frames, feat)
    assert jnp.allclose(y, y_ref, atol=1e-5, rtol=1e-5)

    # bf16-x path (HBM-halving); dct_m stays f32, accumulation stays f32.
    y_bf16 = jax.block_until_ready(dct_forward(dct_m, x, compute_dtype=jnp.bfloat16))
    assert y_bf16.shape == (batch, frames, feat)
    assert jnp.allclose(y_bf16, y_ref, atol=5e-2, rtol=5e-2)

    # Lane-dense feature dim (multiple of 128) exercises the TD-tiling branch.
    x2 = jax.random.normal(jax.random.PRNGKey(1), (batch, frames, 256),
                           dtype=jnp.float32)
    y2 = jax.block_until_ready(dct_forward(dct_m, x2))
    assert jnp.allclose(y2, jnp.einsum("kn,bnd->bkd", dct_m, x2),
                        atol=1e-5, rtol=1e-5)

    print("KERNEL_OK")
</pallas_src>

<mosaic_0001>
module attributes {stable_mosaic.version = 11 : i64} {
  func.func @_dct_kernel(%arg0: i32, %arg1: i32, %arg2: memref<32x32xf32, #tpu.memory_space<vmem>>, %arg3: memref<1x32x64xf32, #tpu.memory_space<vmem>>, %arg4: memref<1x32x64xf32, #tpu.memory_space<vmem>>) attributes {dimension_semantics = [#tpu.dimension_semantics<parallel>, #tpu.dimension_semantics<parallel>], iteration_bounds = array<i64: 2, 1>, scalar_prefetch = 0 : i64, scratch_operands = 0 : i64, tpu.core_type = #tpu.core_type<tc>, window_params = [{pipeline_mode = #tpu.pipeline_mode<synchronous>, transform_indices = @transform_0, window_bounds = array<i64: 32, 32>}, {transform_indices = @transform_1, window_bounds = array<i64: 1, 32, 64>}, {transform_indices = @transform_2, window_bounds = array<i64: 1, 32, 64>}]} {
    %c0 = arith.constant 0 : index
    %c0_0 = arith.constant 0 : index
    %0 = vector.load %arg2[%c0, %c0_0] : memref<32x32xf32, #tpu.memory_space<vmem>>, vector<32x32xf32>
    %1 = vector.shape_cast %0 : vector<32x32xf32> to vector<1x32x32xf32>
    %c0_1 = arith.constant 0 : index
    %c0_2 = arith.constant 0 : index
    %c0_3 = arith.constant 0 : index
    %2 = vector.load %arg3[%c0_1, %c0_2, %c0_3] : memref<1x32x64xf32, #tpu.memory_space<vmem>>, vector<1x32x64xf32>
    "tpu.trace_start"() <{level = 10 : i32, message = "bkn,bnd->bkd"}> : () -> ()
    %cst = arith.constant dense<0.000000e+00> : vector<1x32x64xf32>
    %3 = tpu.matmul %1, %2, %cst {dimension_numbers = #tpu.dot_dimension_numbers<[2], [1], [1], [2], [0, 0, 0, 1, 1, 2], [0], [0]>} : vector<1x32x32xf32>, vector<1x32x64xf32>, vector<1x32x64xf32> -> vector<1x32x64xf32>
    "tpu.trace_stop"() : () -> ()
    %c0_4 = arith.constant 0 : index
    %c0_5 = arith.constant 0 : index
    %c0_6 = arith.constant 0 : index
    %4 = vector.load %arg4[%c0_4, %c0_5, %c0_6] : memref<1x32x64xf32, #tpu.memory_space<vmem>>, vector<1x32x64xf32>
    tpu.vector_store %arg4[%c0_4, %c0_5, %c0_6], %3 {strides = array<i32>} : memref<1x32x64xf32, #tpu.memory_space<vmem>>, vector<1x32x64xf32>,
    return
  }
  func.func @transform_0(%arg0: i32, %arg1: i32) -> (i32, i32) {
    %c0_i32 = arith.constant 0 : i32
    %c0_i32_0 = arith.constant 0 : i32
    %c0_i32_1 = arith.constant 0 : i32
    return %c0_i32, %c0_i32_0 : i32, i32
  }
  func.func @transform_1(%arg0: i32, %arg1: i32) -> (i32, i32, i32) {
    %c0_i32 = arith.constant 0 : i32
    %c0_i32_0 = arith.constant 0 : i32
    return %arg0, %c0_i32, %arg1 : i32, i32, i32
  }
  func.func @transform_2(%arg0: i32, %arg1: i32) -> (i32, i32, i32) {
    %c0_i32 = arith.constant 0 : i32
    %c0_i32_0 = arith.constant 0 : i32
    return %arg0, %c0_i32, %arg1 : i32, i32, i32
  }
}

</mosaic_0001>

<llo_original>
// kernel: tpu_custom_call.1
$region0: #{tpu_custom_call.1}
  #allocation0 [shape = 'u32[]', space=smem, size = 0x4, offset = 0x4, fixed_abs, tag = 'smem constant byte address 0x4 - core index']
  #allocation1 [shape = 'u32[144,128]{1,0:T(1,128)}', space=vmem, size = 0x12000, scoped, tag = 'internal scratch']
  %s0 = inlined_call_operand.hbm [shape: f32[32,32], index: 0, kind: input, shape index: {}]
  %s1 = inlined_call_operand.hbm [shape: f32[2,32,64], index: 1, kind: input, shape index: {}]
  %s2 = inlined_call_operand.hbm [shape: f32[2,32,64], index: 2, kind: output, shape index: {}]
  %s3 = sld [smem:[#allocation0]]
  $region49: #{tpu_custom_call.1} parent=0
    _
  %s5 = ssub.s32 1, %s3
  %s6 = scalar_select 0, %s5, %s3
  $region1: #{tpu_custom_call.1} parent=0
    #allocation2 [shape = 'u8[16384]{0}', space=vmem, size = 0x4000, scoped, tag = 'input window, operand 0, single buffered']
    #allocation3 [shape = 's32[2]{0}', space=sflag, size = 0x8, scoped, tag = 'scoped memory for tpu_custom_call.1']
    #allocation4 [shape = 's32[2]{0}', space=sflag, size = 0x8, scoped, tag = 'scoped memory for tpu_custom_call.1']
    #allocation5 [shape = 'u8[32768]{0}', space=vmem, size = 0x8000, scoped, tag = 'input window, operand 1']
    #allocation6 [shape = 's32[2]{0}', space=sflag, size = 0x8, scoped, tag = 'scoped memory for tpu_custom_call.1']
    #allocation7 [shape = 'u8[32768]{0}', space=vmem, size = 0x8000, scoped, tag = 'output window, operand 0']
    %7 = vsyncpa [#allocation3], 0
    %8 = vsyncpa [#allocation6], 0
    %s9 = scalar_lea.sflag [#allocation6], 1
    %10 = vsyncpa %s9, 0
    %11 = vsyncpa [#allocation4], 0
    %s12 = scalar_lea.sflag [#allocation4], 1
    %13 = vsyncpa %s12, 0
    loop: start=0, step=1, limit=4
    $region2: #{tpu_custom_call.1} parent=1 // loop_pre_header
      _
    $region3: #{tpu_custom_call.1} parent=1 // loop_header
      %s15 = sphi 0, %s19
      %p16 = scmp.ge.s32.totalorder %s15, 4
      %s22 = sphi 0, %s34
      %s23 = sphi 0, %s30
      %s24 = sphi 0, %s22
      %s25 = sphi 0, %s23
      %s26 = sphi 0, %s24
      %s27 = sphi 0, %s25
      %s35 = sphi 0, %s35
      %s37 = sphi 0, %s35
      %s38 = sphi 0, %s37
      %s52 = sphi 0, %s38
      %s60 = sphi 0, %s62
      %s63 = sphi 0, %s60
      %s64 = sphi 0, %s63
      %s80 = sphi 0, %s64
      %s88 = sphi 0, %s90
      %s91 = sphi 0, %s88
      %s92 = sphi 0, %s91
      %s108 = sphi 0, %s92
    $region4: #{tpu_custom_call.1} parent=1 // loop_header_branch
      %18 = sbr.rel (%p16) target = $region8
    $region5: #{tpu_custom_call.1} parent=1 // loop_body
      %s20 = ssub.s32 %s15, 1
      %s21 = ssub.s32 %s15, 2
      %s28 = sadd.s32 1, %s23
      %p29 = scmp.ge.s32.totalorder %s28, 1
      %s30 = scalar_select %p29, 0, %s28
      %s31 = sadd.s32 1, %s22
      %s32 = scalar_select %p29, %s31, %s22
      %p33 = scmp.ge.s32.totalorder %s32, 2
      %s34 = scalar_select %p33, 0, %s32
      %s36 = sadd.s32 %s35, 1
      %p39 = scmp.eq.s32.totalorder %s15, 1
      %p40 = scmp.ne.s32.totalorder %s35, %s37
      %p41 = scmp.eq.s32.totalorder %s15, 0
      %p42 = por %p40, %p41
      %p43 = scmp.ne.s32.totalorder %s35, %s37
      %p44 = scmp.eq.s32.totalorder %s20, 1
      %p45 = por %p43, %p44
      %p46 = scmp.ne.s32.totalorder %s37, %s38
      %p47 = scmp.eq.s32.totalorder %s20, 0
      %p48 = por %p46, %p47
      %p49 = scmp.ne.s32.totalorder %s37, %s38
      %p50 = scmp.eq.s32.totalorder %s21, 1
      %p51 = por %p49, %p50
      %p53 = scmp.ne.s32.totalorder %s38, %s52
      %p54 = scmp.eq.s32.totalorder %s21, 0
      %p55 = por %p53, %p54
      %s56 = ssub.s32 %s22, %s34
      %s57 = ssub.s32 %s23, %s30
      %s58 = sor.u32 %s56, %s57
      %p59 = scmp.eq.s32.totalorder %s58, 0
      %s61 = sadd.s32 %s60, 1
      %s62 = scalar_select %p59, %s60, %s61
      %p65 = pneg %p59
      %p66 = scmp.eq.s32.totalorder %s15, 1
      %p67 = por %p65, %p66
      %p68 = scmp.ne.s32.totalorder %s60, %s63
      %p69 = scmp.eq.s32.totalorder %s15, 0
      %p70 = por %p68, %p69
      %p71 = scmp.ne.s32.totalorder %s60, %s63
      %p72 = scmp.eq.s32.totalorder %s20, 1
      %p73 = por %p71, %p72
      %p74 = scmp.ne.s32.totalorder %s63, %s64
      %p75 = scmp.eq.s32.totalorder %s20, 0
      %p76 = por %p74, %p75
      %p77 = scmp.ne.s32.totalorder %s63, %s64
      %p78 = scmp.eq.s32.totalorder %s21, 1
      %p79 = por %p77, %p78
      %p81 = scmp.ne.s32.totalorder %s64, %s80
      %p82 = scmp.eq.s32.totalorder %s21, 0
      %p83 = por %p81, %p82
      %s84 = ssub.s32 %s22, %s34
      %s85 = ssub.s32 %s23, %s30
      %s86 = sor.u32 %s84, %s85
      %p87 = scmp.eq.s32.totalorder %s86, 0
      %s89 = sadd.s32 %s88, 1
      %s90 = scalar_select %p87, %s88, %s89
      %p93 = pneg %p87
      %p94 = scmp.eq.s32.totalorder %s15, 1
      %p95 = por %p93, %p94
      %p96 = scmp.ne.s32.totalorder %s88, %s91
      %p97 = scmp.eq.s32.totalorder %s15, 0
      %p98 = por %p96, %p97
      %p99 = scmp.ne.s32.totalorder %s88, %s91
      %p100 = scmp.eq.s32.totalorder %s20, 1
      %p101 = por %p99, %p100
      %p102 = scmp.ne.s32.totalorder %s91, %s92
      %p103 = scmp.eq.s32.totalorder %s20, 0
      %p104 = por %p102, %p103
      %p105 = scmp.ne.s32.totalorder %s91, %s92
      %p106 = scmp.eq.s32.totalorder %s21, 1
      %p107 = por %p105, %p106
      %p109 = scmp.ne.s32.totalorder %s92, %s108
      %p110 = scmp.eq.s32.totalorder %s21, 0
      %p111 = por %p109, %p110
      %p112 = scmp.le.s32.totalorder 1, %s15
      %p113 = scmp.lt.s32.totalorder %s15, 3
      %p114 = pnand %p112, %p113
      %p115 = pneg %p114
      // Predicated region
      $region9: #{tpu_custom_call.1} parent=5 // pred_check
        _
      $region10: #{tpu_custom_call.1} parent=5 // pred_check_branch
        %117 = sbr.rel (%p114) target = $region12
      $region11: #{tpu_custom_call.1} parent=5 // pred_region
        %s118 = ssub.s32 %s15, 1
        // Predicated region
        $region13: #{tpu_custom_call.1} parent=11 // pred_check
          %p119 = pneg %p48
        $region14: #{tpu_custom_call.1} parent=11 // pred_check_branch
          %121 = sbr.rel (%p119) target = $region16
        $region15: #{tpu_custom_call.1} parent=11 // pred_region
          %s123 = ssub.s32 512, 512
          %124 = vsyncadd [#allocation3], %s123
          %s125 = sshll.u32 [#allocation2], 4
          %s126 = int_to_ptr.vmem [resolvable:$true] %s125
          %131 = dma.hbm_to_vmem [thread:$0]  %s0, 512, %s126, [#allocation3], 128, 128, 8
        $region16: #{tpu_custom_call.1} parent=11 // pred_fallthru
          _
      $region12: #{tpu_custom_call.1} parent=5 // pred_fallthru
        _
      %p132 = scmp.lt.s32.totalorder %s15, 2
      // Predicated region
      $region17: #{tpu_custom_call.1} parent=5 // pred_check
        %p133 = pneg %p132
      $region18: #{tpu_custom_call.1} parent=5 // pred_check_branch
        %135 = sbr.rel (%p133) target = $region20
      $region19: #{tpu_custom_call.1} parent=5 // pred_region
        // Predicated region
        $region21: #{tpu_custom_call.1} parent=19 // pred_check
          %p136 = pneg %p70
        $region22: #{tpu_custom_call.1} parent=19 // pred_check_branch
          %138 = sbr.rel (%p136) target = $region24
        $region23: #{tpu_custom_call.1} parent=19 // pred_region
          %s139 = sand.u32 %s60, 1
          %s140 = scalar_lea.sflag [#allocation6], %s139
          %s141 = sand.u32 %s60, 1
          %s142 = smul.addr %s141, 32
          %s143 = scalar_lea.vmem [#allocation5], %s142
          %s145 = ssub.s32 512, 512
          %146 = vsyncadd %s140, %s145
          %s147 = smul.addr %s22, 4
          %s148 = sadd.s32 %s23, %s147
          %s149 = smul.addr %s148, 128
          %s150 = scalar_lea.hbm %s1, %s149
          %s151 = sshll.u32 %s143, 4
          %s152 = int_to_ptr.vmem [resolvable:$true] %s151
          %157 = dma.hbm_to_vmem [thread:$0]  %s150, 512, %s152, %s140, 128, 128, 8
        $region24: #{tpu_custom_call.1} parent=19 // pred_fallthru
          _
      $region20: #{tpu_custom_call.1} parent=5 // pred_fallthru
        _
      %p158 = scmp.le.s32.totalorder 1, %s15
      %p159 = scmp.lt.s32.totalorder %s15, 3
      %p160 = pnand %p158, %p159
      %p161 = pneg %p160
      // Predicated region
      $region25: #{tpu_custom_call.1} parent=5 // pred_check
        _
      $region26: #{tpu_custom_call.1} parent=5 // pred_check_branch
        %163 = sbr.rel (%p160) target = $region28
      $region27: #{tpu_custom_call.1} parent=5 // pred_region
        %s164 = ssub.s32 %s15, 1
        // Predicated region
        $region29: #{tpu_custom_call.1} parent=27 // pred_check
          %p165 = pneg %p48
        $region30: #{tpu_custom_call.1} parent=27 // pred_check_branch
          %167 = sbr.rel (%p165) target = $region32
        $region31: #{tpu_custom_call.1} parent=27 // pred_region
          %168 = dma.done [#allocation3], 512
        $region32: #{tpu_custom_call.1} parent=27 // pred_fallthru
          _
        %s169 = sand.u32 %s63, 1
        %s170 = scalar_lea.sflag [#allocation6], %s169
        %s171 = sand.u32 %s63, 1
        %s172 = smul.addr %s171, 32
        %s173 = scalar_lea.vmem [#allocation5], %s172
        // Predicated region
        $region33: #{tpu_custom_call.1} parent=27 // pred_check
          %p174 = pneg %p76
        $region34: #{tpu_custom_call.1} parent=27 // pred_check_branch
          %176 = sbr.rel (%p174) target = $region36
        $region35: #{tpu_custom_call.1} parent=27 // pred_region
          %177 = dma.done %s170, 512
        $region36: #{tpu_custom_call.1} parent=27 // pred_fallthru
          _
        %p178 = pneg %p48
        %p179 = pneg %p45
        %s180 = sand.u32 %s63, 1
        %s181 = scalar_lea.sflag [#allocation6], %s180
        %s182 = sand.u32 %s63, 1
        %s183 = smul.addr %s182, 32
        %s184 = scalar_lea.vmem [#allocation5], %s183
        %p185 = pneg %p76
        %p186 = pneg %p73
        %p187 = pneg %p104
        %p188 = pneg %p101
        %s189 = sand.u32 %s91, 1
        %s190 = scalar_lea.sflag [#allocation4], %s189
        %s191 = sand.u32 %s91, 1
        %s192 = smul.addr %s191, 32
        %s193 = scalar_lea.vmem [#allocation7], %s192
        %v194 = vld [vmem:[#allocation2] sm:$0xff]
        %v195 = vld [vmem:[#allocation2 + $0x8] sm:$0xff]
        %v196 = vld [vmem:[#allocation2 + $0x10] sm:$0xff]
        %v197 = vld [vmem:[#allocation2 + $0x18] sm:$0xff]
        %v198 = vld [vmem:[%s173] sm:$0xff]
        %v199 = vld [vmem:[%s173 + $0x8] sm:$0xff]
        %v200 = vld [vmem:[%s173 + $0x10] sm:$0xff]
        %v201 = vld [vmem:[%s173 + $0x18] sm:$0xff]
        %vm202 = vcmask 261120
        %v204 = vsel %vm202, %v194, 0
        %v207 = vsel %vm202, %v195, 0
        %v210 = vsel %vm202, %v196, 0
        %v213 = vsel %vm202, %v197, 0
        %215 = vmatprep.subr.mxu0 0.0
        %216 = vmatpush1.msra.mxu0 %v198
        %217 = vmatprep.subr.mxu0 0.0
        %218 = vmatpush1.msra.mxu0 %v199
        %219 = vmatprep.subr.mxu0 0.0
        %220 = vmatpush1.msra.mxu0 %v200
        %221 = vmatprep.subr.mxu0 0.0
        %222 = vmatpush1.msra.mxu0 %v201
        %223 = vmatprep.subr.mxu0 0.0
        %224 = vmatpush1.msra.mxu0 0.0
        %225 = vmatprep.subr.mxu0 0.0
        %226 = vmatpush1.msra.mxu0 0.0
        %227 = vmatprep.subr.mxu0 0.0
        %228 = vmatpush1.msra.mxu0 0.0
        %229 = vmatprep.subr.mxu0 0.0
        %230 = vmatpush1.msra.mxu0 0.0
        %231 = vmatprep.subr.mxu0 0.0
        %232 = vmatpush1.msra.mxu0 0.0
        %233 = vmatprep.subr.mxu0 0.0
        %234 = vmatpush1.msra.mxu0 0.0
        %235 = vmatprep.subr.mxu0 0.0
        %236 = vmatpush1.msra.mxu0 0.0
        %237 = vmatprep.subr.mxu0 0.0
        %238 = vmatpush1.msra.mxu0 0.0
        %239 = vmatprep.subr.mxu0 0.0
        %240 = vmatpush1.msra.mxu0 0.0
        %241 = vmatprep.subr.mxu0 0.0
        %242 = vmatpush1.msra.mxu0 0.0
        %243 = vmatprep.subr.mxu0 0.0
        %244 = vmatpush1.msra.mxu0 0.0
        %245 = vmatprep.subr.mxu0 0.0
        %246 = vmatpush1.msra.mxu0 0.0
        %247 = vmatprep.subr.mxu0 0.0
        %248 = vmatpush1.msra.mxu0 0.0
        %249 = vmatprep.subr.mxu0 0.0
        %250 = vmatpush1.msra.mxu0 0.0
        %251 = vmatprep.subr.mxu0 0.0
        %252 = vmatpush1.msra.mxu0 0.0
        %253 = vmatprep.subr.mxu0 0.0
        %254 = vmatpush1.msra.mxu0 0.0
        %255 = vmatprep.subr.mxu0 0.0
        %256 = vmatpush1.msra.mxu0 0.0
        %257 = vmatprep.subr.mxu0 0.0
        %258 = vmatpush1.msra.mxu0 0.0
        %259 = vmatprep.subr.mxu0 0.0
        %260 = vmatpush1.msra.mxu0 0.0
        %261 = vmatprep.subr.mxu0 0.0
        %262 = vmatpush1.msra.mxu0 0.0
        %263 = vmatprep.subr.mxu0 0.0
        %264 = vmatpush1.msra.mxu0 0.0
        %265 = vmatprep.subr.mxu0 0.0
        %266 = vmatpush1.msra.mxu0 0.0
        %267 = vmatprep.subr.mxu0 0.0
        %268 = vmatpush1.msra.mxu0 0.0
        %269 = vmatprep.subr.mxu0 0.0
        %270 = vmatpush1.msra.mxu0 0.0
        %271 = vmatprep.subr.mxu0 0.0
        %272 = vmatpush1.msra.mxu0 0.0
        %273 = vmatprep.subr.mxu0 0.0
        %274 = vmatpush1.msra.mxu0 0.0
        %275 = vmatprep.subr.mxu0 0.0
        %276 = vmatpush1.msra.mxu0 0.0
        %277 = vmatprep.subr.mxu0 0.0
        %278 = vmatpush1.msra.mxu0 0.0
        %279 = vmatprep.mubr.f32.mxu0 0.0
        %280 = vmatmul.mubr.f32.gmra.mrb[0].mxu0 %v204
        %v281 = vpop.f32.mrb[0].mxu0
        %v282 = vadd.f32 0.0, %v281
        %v283 = vpop.f32.mrb[0].mxu0
        %284 = vmatprep.mubr.f32.mxu0 0.0
        %285 = vmatmul.mubr.f32.gmra.mrb[0].mxu0 %v207
        %v286 = vpop.f32.mrb[0].mxu0
        %v287 = vadd.f32 0.0, %v286
        %v288 = vpop.f32.mrb[0].mxu0
        %289 = vmatprep.mubr.f32.mxu0 0.0
        %290 = vmatmul.mubr.f32.gmra.mrb[0].mxu0 %v210
        %v291 = vpop.f32.mrb[0].mxu0
        %v292 = vadd.f32 0.0, %v291
        %v293 = vpop.f32.mrb[0].mxu0
        %294 = vmatprep.mubr.f32.mxu0 0.0
        %295 = vmatmul.mubr.f32.gmra.mrb[0].mxu0 %v213
        %v296 = vpop.f32.mrb[0].mxu0
        %v297 = vadd.f32 0.0, %v296
        %v298 = vpop.f32.mrb[0].mxu0
        %299 = vdwg.mxu0
        %vm300 = vcmask 523264
        %301 = vst.msk [vmem:[%s193] sm:$0xff] %vm300, %v282
        %302 = vst.msk [vmem:[%s193 + $0x8] sm:$0xff] %vm300, %v287
        %303 = vst.msk [vmem:[%s193 + $0x10] sm:$0xff] %vm300, %v292
        %304 = vst.msk [vmem:[%s193 + $0x18] sm:$0xff] %vm300, %v297
        %s305 = sand.u32 %s91, 1
        %s306 = scalar_lea.sflag [#allocation4], %s305
        %s307 = sand.u32 %s91, 1
        %s308 = smul.addr %s307, 32
        %s309 = scalar_lea.vmem [#allocation7], %s308
        // Predicated region
        $region37: #{tpu_custom_call.1} parent=27 // pred_check
          %p310 = pneg %p101
        $region38: #{tpu_custom_call.1} parent=27 // pred_check_branch
          %312 = sbr.rel (%p310) target = $region40
        $region39: #{tpu_custom_call.1} parent=27 // pred_region
          %s314 = ssub.s32 512, 512
          %315 = vsyncadd %s306, %s314
          %s316 = smul.addr %s24, 4
          %s317 = sadd.s32 %s25, %s316
          %s318 = smul.addr %s317, 128
          %s319 = scalar_lea.hbm %s2, %s318
          %s320 = sshll.u32 %s309, 4
          %s321 = int_to_ptr.vmem [resolvable:$true] %s320
          %326 = dma.vmem_to_hbm [thread:$0]  %s321, 512, %s319, %s306, 128, 128, 8
        $region40: #{tpu_custom_call.1} parent=27 // pred_fallthru
          _
      $region28: #{tpu_custom_call.1} parent=5 // pred_fallthru
        _
      %p327 = scmp.le.s32.totalorder 2, %s15
      // Predicated region
      $region41: #{tpu_custom_call.1} parent=5 // pred_check
        %p328 = pneg %p327
      $region42: #{tpu_custom_call.1} parent=5 // pred_check_branch
        %330 = sbr.rel (%p328) target = $region44
      $region43: #{tpu_custom_call.1} parent=5 // pred_region
        %s331 = ssub.s32 %s15, 2
        // Predicated region
        $region45: #{tpu_custom_call.1} parent=43 // pred_check
          %p332 = pneg %p107
        $region46: #{tpu_custom_call.1} parent=43 // pred_check_branch
          %334 = sbr.rel (%p332) target = $region48
        $region47: #{tpu_custom_call.1} parent=43 // pred_region
          %s335 = sand.u32 %s92, 1
          %s336 = scalar_lea.sflag [#allocation4], %s335
          %s337 = sand.u32 %s92, 1
          %s338 = smul.addr %s337, 32
          %s339 = scalar_lea.vmem [#allocation7], %s338
          %340 = dma.done %s336, 512
        $region48: #{tpu_custom_call.1} parent=43 // pred_fallthru
          _
      $region44: #{tpu_custom_call.1} parent=5 // pred_fallthru
        _
    $region6: #{tpu_custom_call.1} parent=1 // loop_footer
      %s19 = sadd.s32 1, %s15
    $region7: #{tpu_custom_call.1} parent=1 // loop_footer_branch
      %14 = sbr.rel target = $region3
    $region8: #{tpu_custom_call.1} parent=1 // loop_exit
      _
    %341 = vsyncpa [#allocation3], 1
    %s342 = scalar_lea.sflag [#allocation3], 1
    %343 = vsyncpa %s342, 1
    %344 = vsyncpa [#allocation6], 1
    %s345 = scalar_lea.sflag [#allocation6], 1
    %346 = vsyncpa %s345, 1
    %347 = vsyncpa [#allocation4], 1
    %s348 = scalar_lea.sflag [#allocation4], 1
    %349 = vsyncpa %s348, 1

</llo_original>
